<compile_context>
chip_gen: v5e
topology: v5e:2x2
jax: 0.10.0
libtpu: 0.0.40
codegen_flags: <defaults>
</compile_context>

<pallas_src>
import jax
import jax.numpy as jnp
from jax import lax
from jax.experimental import pallas as pl
from jax.experimental.pallas import tpu as pltpu


# ----------------------------------------------------------------------------
# Kernel factory
# ----------------------------------------------------------------------------
def _make_kernel(Rb, H, W, c_in, c_mid, c_out, relu2, mxu_dtype):
    WC0, WC1, WC2 = W * c_in, W * c_mid, W * c_out

    def dp_unit(y, w_pw, aux_ref, C, WC, relu, top, bot):
        # --- 1x1 conv: block-diagonal matmul on the MXU (f32 accumulate) ----
        z = jnp.dot(y.astype(mxu_dtype), w_pw,
                    preferred_element_type=jnp.float32)
        z = z + aux_ref[9:10, :]                       # conv1 bias (tiled)

        # --- 3x3 depthwise conv (pad=1), BN folded --------------------------
        # aux rows 0..8 hold the 9 taps: BN-scale folded, tiled over W, and
        # the zero-padding column masks (dx edges) folded in as zeros.
        # Row shifts (dy) are sublane rolls + a per-image row mask; column
        # shifts (dx) are lane rolls by C.
        acc = jnp.broadcast_to(aux_ref[10:11, :], (Rb, WC)).astype(jnp.float32)
        for dy in range(3):
            if dy == 0:       # reads row h-1 -> zero at local row 0
                yr = jnp.where(top, pltpu.roll(z, shift=1, axis=0), 0.0)
            elif dy == 2:     # reads row h+1 -> zero at local row H-1
                yr = jnp.where(bot, pltpu.roll(z, shift=Rb - 1, axis=0), 0.0)
            else:
                yr = z
            for dx in range(3):
                s = ((1 - dx) * C) % WC               # lane roll amount
                ys = yr if s == 0 else pltpu.roll(yr, shift=s, axis=1)
                acc = acc + ys * aux_ref[dy * 3 + dx:dy * 3 + dx + 1, :]

        if relu:
            acc = jnp.maximum(acc, 0.0)
        return acc

    def kernel(x_ref, pw_ref, aux1_ref, aux2_ref, o_ref):
        x = x_ref[...]                                 # (Rb, W*c_in)

        # Per-image row index / masks: built ONCE per grid step and reused by
        # both units (dy edge handling).  row % H keeps batched images from
        # reading each other's rows after the sublane roll.
        row = lax.broadcasted_iota(jnp.int32, (Rb, 1), 0) % H
        top = row > 0
        bot = row < H - 1

        w1 = pw_ref[:, :WC1]                           # (W*c_in, W*c_mid)
        w2 = pw_ref[:, WC1:WC1 + WC2]                  # (W*c_mid, W*c_out)
        h = dp_unit(x, w1, aux1_ref, c_mid, WC1, True, top, bot)
        out = dp_unit(h, w2, aux2_ref, c_out, WC2, relu2, top, bot)
        o_ref[...] = out.astype(o_ref.dtype)

    return kernel


# ----------------------------------------------------------------------------
# Trace-time parameter packing / constant folding
# ----------------------------------------------------------------------------
def _pack_unit(w_pw, b_pw, w_dw, b_dw, scale, shift, W):
    """Fold BN + biases and pack one ConvDPUnit into (pw_blockdiag, aux).

    pw_blockdiag : (W*c_in, W*c_out)  block-diagonal 1x1-conv weight
    aux          : (11, W*c_out)      rows 0..8 = depthwise taps (BN scale and
                                      zero-pad column masks folded, tiled over W)
                                      row 9     = pointwise bias, tiled
                                      row 10    = b_dw*scale + shift, tiled
    """
    c_out = w_pw.shape[1]
    WC = W * c_out

    pw_bd = jnp.kron(jnp.eye(W, dtype=w_pw.dtype), w_pw)        # (W*cin, W*cout)

    taps = jnp.tile(w_dw * scale, (1, W))                       # (9, WC)
    widx = jnp.arange(WC) // c_out                              # w position per lane
    dxpos = jnp.arange(9) % 3
    keep = jnp.where(dxpos[:, None] == 0, (widx >= 1)[None, :], True)
    keep = keep & jnp.where(dxpos[:, None] == 2, (widx <= W - 2)[None, :], True)
    taps = taps * keep.astype(taps.dtype)

    bpw_tiled = jnp.tile(b_pw.reshape(1, c_out), (1, W))        # (1, WC)
    bias_comb = jnp.tile((b_dw * scale + shift).reshape(1, c_out), (1, W))

    aux = jnp.concatenate([taps, bpw_tiled, bias_comb], axis=0)  # (11, WC)
    return pw_bd, aux


# ----------------------------------------------------------------------------
# Batch-block / grid selection
# ----------------------------------------------------------------------------
def _min_grid_steps(N):
    """>=2 parallel grid steps on v7x (2 TensorCores); 1 on v5e/v6e (1 TC)."""
    try:
        kind = jax.devices()[0].device_kind.lower()
    except Exception:
        kind = ""
    two_tc = ("v7" in kind) or ("7x" in kind)
    return min(N, 2) if two_tc else 1


def _choose_images_per_block(N, H, min_steps, target_rows=256):
    """Largest divisor Nb of N with Nb*H <= target_rows and N//Nb >= min_steps."""
    best = 1
    cap = max(target_rows, H)
    for nb in range(1, N + 1):
        if N % nb == 0 and nb * H <= cap and (N // nb) >= min_steps:
            best = nb
    return best


# ----------------------------------------------------------------------------
# Wrapper
# ----------------------------------------------------------------------------
def conv4layer_block(x_nhwc, params, *, with_bnrelu2=True,
                     mxu_dtype=jnp.bfloat16, target_rows=256):
    """x_nhwc: (N, H, W, c_in) float32 -> (N, H, W, c_out) float32."""
    N, H, W, c_in = x_nhwc.shape
    (w1, b1, dw1, db1, s1, t1, w2, b2, dw2, db2, s2, t2) = params
    c_mid = w1.shape[1]
    c_out = w2.shape[1]
    assert c_mid == c_in, "Conv4layerBlock has conv1 = ConvDPUnit(in, in)"

    WC0, WC1, WC2 = W * c_in, W * c_mid, W * c_out

    pw1, aux1 = _pack_unit(w1, b1, dw1, db1, s1, t1, W)
    pw2, aux2 = _pack_unit(w2, b2, dw2, db2, s2, t2, W)
    # MXU operands in bf16 (f32 accumulation in the kernel); halves weight DMA.
    pw_all = jnp.concatenate([pw1, pw2], axis=1).astype(mxu_dtype)

    # Lane-dense (rows, W*C) slab; free metadata reshape at the XLA level.
    rows = N * H
    x_rows = x_nhwc.reshape(rows, WC0)

    Nb = _choose_images_per_block(N, H, _min_grid_steps(N), target_rows)
    Rb = Nb * H
    steps = N // Nb

    kernel = _make_kernel(Rb, H, W, c_in, c_mid, c_out, with_bnrelu2, mxu_dtype)

    flops = 2 * rows * (WC0 * WC1 + WC1 * WC2) + 2 * 9 * rows * (WC1 + WC2)
    bytes_accessed = (4 * rows * (WC0 + WC2)
                      + pw_all.size * pw_all.dtype.itemsize
                      + 4 * (aux1.size + aux2.size))

    out = pl.pallas_call(
        kernel,
        out_shape=jax.ShapeDtypeStruct((rows, WC2), jnp.float32),
        grid=(steps,),
        in_specs=[
            pl.BlockSpec((Rb, WC0), lambda n: (n, 0)),
            # Constant-index-map operands (revisited every step).
            pl.BlockSpec((WC0, WC1 + WC2), lambda n: (0, 0)),
            pl.BlockSpec((11, WC1), lambda n: (0, 0)),
            pl.BlockSpec((11, WC2), lambda n: (0, 0)),
        ],
        out_specs=pl.BlockSpec((Rb, WC2), lambda n: (n, 0)),
        compiler_params=pltpu.CompilerParams(
            dimension_semantics=("parallel",)),
        cost_estimate=pl.CostEstimate(
            flops=int(flops),
            transcendentals=0,
            bytes_accessed=int(bytes_accessed)),
    )(x_rows, pw_all, aux1, aux2)

    return out.reshape(N, H, W, c_out)


# ----------------------------------------------------------------------------
# Deterministic parameter construction + pure-JAX reference
# ----------------------------------------------------------------------------
def make_params(key, c_in, c_out, with_bnrelu2=True):
    """Parameters for Conv4layerBlock(c_in, c_out).

    ConvDPUnit(cin, cmid): 1x1 conv (cin->cmid) + 3x3 depthwise(cmid) + BN.
    BN is in inference mode with freshly-initialized running stats ->
    scale = 1/sqrt(1+eps), shift = 0 (gamma=1, beta=0, mean=0, var=1).
    """
    eps = 1e-5
    keys = jax.random.split(key, 8)

    def unit(kws, cin, cmid, with_bn):
        k0, k1, k2, k3 = kws
        w_pw = jax.random.normal(k0, (cin, cmid), jnp.float32) * 0.2
        b_pw = jax.random.normal(k1, (1, cmid), jnp.float32) * 0.1
        w_dw = jax.random.normal(k2, (9, cmid), jnp.float32) * 0.2   # (ky*3+kx, c)
        b_dw = jax.random.normal(k3, (1, cmid), jnp.float32) * 0.1
        if with_bn:
            scale = jnp.full((1, cmid), 1.0 / jnp.sqrt(1.0 + eps), jnp.float32)
        else:
            scale = jnp.ones((1, cmid), jnp.float32)
        shift = jnp.zeros((1, cmid), jnp.float32)
        return w_pw, b_pw, w_dw, b_dw, scale, shift

    u1 = unit(keys[0:4], c_in, c_in, True)           # ConvDPUnit(in, in, True)
    u2 = unit(keys[4:8], c_in, c_out, with_bnrelu2)  # ConvDPUnit(in, out, withBNRelu)
    return u1 + u2


def conv4layer_ref(x, params, *, with_bnrelu2=True):
    (w1, b1, dw1, db1, s1, t1, w2, b2, dw2, db2, s2, t2) = params

    def unit(x, w_pw, b_pw, w_dw, b_dw, scale, shift, relu):
        C = w_pw.shape[1]
        y = jnp.einsum("nhwc,cd->nhwd", x, w_pw) + b_pw[0]
        k = w_dw.reshape(3, 3, 1, C)                  # HWIO, depthwise
        y = lax.conv_general_dilated(
            y, k, window_strides=(1, 1), padding="SAME",
            dimension_numbers=("NHWC", "HWIO", "NHWC"),
            feature_group_count=C) + b_dw[0]
        y = y * scale[0] + shift[0]
        if relu:
            y = jnp.maximum(y, 0.0)
        return y

    h = unit(x, w1, b1, dw1, db1, s1, t1, True)
    return unit(h, w2, b2, dw2, db2, s2, t2, with_bnrelu2)


# ----------------------------------------------------------------------------
if __name__ == "__main__":
    key = jax.random.PRNGKey(0)
    k_x, k_p = jax.random.split(key)

    # NHWC (2,16,16,8) == PyTorch NCHW input [2, 8, 16, 16]
    N, C_IN, C_OUT, H, W = 2, 8, 16, 16, 16
    x = jax.random.normal(k_x, (N, H, W, C_IN), jnp.float32)
    params = make_params(k_p, C_IN, C_OUT, with_bnrelu2=True)

    ref = conv4layer_ref(x, params, with_bnrelu2=True)

    # f32 MXU path: validates layout / roll / mask logic at tight tolerance.
    out_f32 = jax.block_until_ready(
        conv4layer_block(x, params, with_bnrelu2=True, mxu_dtype=jnp.float32))
    assert out_f32.shape == (N, H, W, C_OUT)
    assert jnp.allclose(out_f32, ref, atol=1e-4, rtol=1e-4), (
        float(jnp.max(jnp.abs(out_f32 - ref))))

    # bf16 MXU path (default / fast): f32 accumulation, looser tolerance.
    out_bf16 = jax.block_until_ready(
        conv4layer_block(x, params, with_bnrelu2=True, mxu_dtype=jnp.bfloat16))
    assert out_bf16.shape == (N, H, W, C_OUT)
    assert jnp.allclose(out_bf16, ref, atol=3e-2, rtol=3e-2), (
        float(jnp.max(jnp.abs(out_bf16 - ref))))

    print("KERNEL_OK")
</pallas_src>

<mosaic_0001>
module attributes {stable_mosaic.version = 11 : i64} {
  func.func @kernel(%arg0: i32, %arg1: memref<32x128xf32, #tpu.memory_space<vmem>>, %arg2: memref<128x384xf32, #tpu.memory_space<vmem>>, %arg3: memref<11x128xf32, #tpu.memory_space<vmem>>, %arg4: memref<11x256xf32, #tpu.memory_space<vmem>>, %arg5: memref<32x256xf32, #tpu.memory_space<vmem>>) attributes {dimension_semantics = [#tpu.dimension_semantics<parallel>], iteration_bounds = array<i64: 1>, scalar_prefetch = 0 : i64, scratch_operands = 0 : i64, tpu.core_type = #tpu.core_type<tc>, window_params = [{transform_indices = @transform_0, window_bounds = array<i64: 32, 128>}, {pipeline_mode = #tpu.pipeline_mode<synchronous>, transform_indices = @transform_1, window_bounds = array<i64: 128, 384>}, {pipeline_mode = #tpu.pipeline_mode<synchronous>, transform_indices = @transform_2, window_bounds = array<i64: 11, 128>}, {pipeline_mode = #tpu.pipeline_mode<synchronous>, transform_indices = @transform_3, window_bounds = array<i64: 11, 256>}, {transform_indices = @transform_4, window_bounds = array<i64: 32, 256>}]} {
    %c0 = arith.constant 0 : index
    %c0_0 = arith.constant 0 : index
    %0 = vector.load %arg1[%c0, %c0_0] : memref<32x128xf32, #tpu.memory_space<vmem>>, vector<32x128xf32>
    %1 = tpu.iota {dimensions = array<i32: 0>} : vector<32x1xi32>
    %c16_i32 = arith.constant 16 : i32
    %c0_i32 = arith.constant 0 : i32
    %2 = arith.cmpi eq, %c16_i32, %c0_i32 : i32
    %c1_i32 = arith.constant 1 : i32
    %3 = arith.select %2, %c1_i32, %c16_i32 : i32
    %4 = vector.broadcast %3 : i32 to vector<32x1xi32>
    %5 = arith.remsi %1, %4 : vector<32x1xi32>
    %c0_i32_1 = arith.constant 0 : i32
    %6 = vector.broadcast %c0_i32_1 : i32 to vector<32x1xi32>
    %7 = arith.cmpi ne, %5, %6 : vector<32x1xi32>
    %c0_i32_2 = arith.constant 0 : i32
    %8 = vector.broadcast %c0_i32_2 : i32 to vector<32x1xi32>
    %9 = arith.cmpi slt, %5, %8 : vector<32x1xi32>
    %c0_i32_3 = arith.constant 0 : i32
    %10 = arith.cmpi slt, %3, %c0_i32_3 : i32
    %11 = vector.broadcast %10 : i1 to vector<32x1xi1>
    %12 = vector.broadcast %11 : vector<32x1xi1> to vector<32x1xi1>
    %13 = arith.xori %9, %12 : vector<32x1xi1>
    %14 = arith.andi %13, %7 : vector<32x1xi1>
    %15 = vector.broadcast %3 : i32 to vector<32x1xi32>
    %16 = arith.addi %5, %15 : vector<32x1xi32>
    %17 = arith.select %14, %16, %5 : vector<32x1xi1>, vector<32x1xi32>
    %c0_i32_4 = arith.constant 0 : i32
    %18 = vector.broadcast %c0_i32_4 : i32 to vector<32x1xi32>
    %19 = arith.cmpi sgt, %17, %18 : vector<32x1xi32>
    %c15_i32 = arith.constant 15 : i32
    %20 = vector.broadcast %c15_i32 : i32 to vector<32x1xi32>
    %21 = arith.cmpi slt, %17, %20 : vector<32x1xi32>
    %c0_5 = arith.constant 0 : index
    %c0_6 = arith.constant 0 : index
    %22 = vector.load %arg2[%c0_5, %c0_6] : memref<128x384xf32, #tpu.memory_space<vmem>>, vector<128x128xf32>
    %c0_7 = arith.constant 0 : index
    %c128 = arith.constant 128 : index
    %23 = vector.load %arg2[%c0_7, %c128] : memref<128x384xf32, #tpu.memory_space<vmem>>, vector<128x256xf32>
    %cst = arith.constant dense<0.000000e+00> : vector<32x128xf32>
    %24 = tpu.matmul %0, %22, %cst {dimension_numbers = #tpu.dot_dimension_numbers<[1], [0], [0], [1], [0, 0, 1, 1], [], []>} : vector<32x128xf32>, vector<128x128xf32>, vector<32x128xf32> -> vector<32x128xf32>
    %c9 = arith.constant 9 : index
    %c0_8 = arith.constant 0 : index
    %25 = vector.load %arg3[%c9, %c0_8] : memref<11x128xf32, #tpu.memory_space<vmem>>, vector<1x128xf32>
    %26 = vector.broadcast %25 : vector<1x128xf32> to vector<32x128xf32>
    %27 = arith.addf %24, %26 : vector<32x128xf32>
    %c10 = arith.constant 10 : index
    %c0_9 = arith.constant 0 : index
    %28 = vector.load %arg3[%c10, %c0_9] : memref<11x128xf32, #tpu.memory_space<vmem>>, vector<1x128xf32>
    %29 = vector.shape_cast %28 : vector<1x128xf32> to vector<1x128xf32>
    %30 = vector.broadcast %29 : vector<1x128xf32> to vector<32x128xf32>
    %c1_i32_10 = arith.constant 1 : i32
    %31 = tpu.dynamic_rotate %27 by %c1_i32_10 dim 0 : vector<32x128xf32>, i32 -> vector<32x128xf32>
    %cst_11 = arith.constant 0.000000e+00 : f32
    %32 = vector.shape_cast %19 : vector<32x1xi1> to vector<32x1xi1>
    %33 = vector.broadcast %32 : vector<32x1xi1> to vector<32x128xi1>
    %34 = vector.broadcast %cst_11 : f32 to vector<32x128xf32>
    %35 = arith.select %33, %31, %34 : vector<32x128xi1>, vector<32x128xf32>
    %c8_i32 = arith.constant 8 : i32
    %36 = tpu.dynamic_rotate %35 by %c8_i32 dim 1 : vector<32x128xf32>, i32 -> vector<32x128xf32>
    %c0_12 = arith.constant 0 : index
    %c0_13 = arith.constant 0 : index
    %37 = vector.load %arg3[%c0_12, %c0_13] : memref<11x128xf32, #tpu.memory_space<vmem>>, vector<1x128xf32>
    %38 = vector.broadcast %37 : vector<1x128xf32> to vector<32x128xf32>
    %39 = arith.mulf %36, %38 : vector<32x128xf32>
    %40 = arith.addf %30, %39 : vector<32x128xf32>
    %c1 = arith.constant 1 : index
    %c0_14 = arith.constant 0 : index
    %41 = vector.load %arg3[%c1, %c0_14] : memref<11x128xf32, #tpu.memory_space<vmem>>, vector<1x128xf32>
    %42 = vector.broadcast %41 : vector<1x128xf32> to vector<32x128xf32>
    %43 = arith.mulf %35, %42 : vector<32x128xf32>
    %44 = arith.addf %40, %43 : vector<32x128xf32>
    %c120_i32 = arith.constant 120 : i32
    %45 = tpu.dynamic_rotate %35 by %c120_i32 dim 1 : vector<32x128xf32>, i32 -> vector<32x128xf32>
    %c2 = arith.constant 2 : index
    %c0_15 = arith.constant 0 : index
    %46 = vector.load %arg3[%c2, %c0_15] : memref<11x128xf32, #tpu.memory_space<vmem>>, vector<1x128xf32>
    %47 = vector.broadcast %46 : vector<1x128xf32> to vector<32x128xf32>
    %48 = arith.mulf %45, %47 : vector<32x128xf32>
    %49 = arith.addf %44, %48 : vector<32x128xf32>
    %c8_i32_16 = arith.constant 8 : i32
    %50 = tpu.dynamic_rotate %27 by %c8_i32_16 dim 1 : vector<32x128xf32>, i32 -> vector<32x128xf32>
    %c3 = arith.constant 3 : index
    %c0_17 = arith.constant 0 : index
    %51 = vector.load %arg3[%c3, %c0_17] : memref<11x128xf32, #tpu.memory_space<vmem>>, vector<1x128xf32>
    %52 = vector.broadcast %51 : vector<1x128xf32> to vector<32x128xf32>
    %53 = arith.mulf %50, %52 : vector<32x128xf32>
    %54 = arith.addf %49, %53 : vector<32x128xf32>
    %c4 = arith.constant 4 : index
    %c0_18 = arith.constant 0 : index
    %55 = vector.load %arg3[%c4, %c0_18] : memref<11x128xf32, #tpu.memory_space<vmem>>, vector<1x128xf32>
    %56 = vector.broadcast %55 : vector<1x128xf32> to vector<32x128xf32>
    %57 = arith.mulf %27, %56 : vector<32x128xf32>
    %58 = arith.addf %54, %57 : vector<32x128xf32>
    %c120_i32_19 = arith.constant 120 : i32
    %59 = tpu.dynamic_rotate %27 by %c120_i32_19 dim 1 : vector<32x128xf32>, i32 -> vector<32x128xf32>
    %c5 = arith.constant 5 : index
    %c0_20 = arith.constant 0 : index
    %60 = vector.load %arg3[%c5, %c0_20] : memref<11x128xf32, #tpu.memory_space<vmem>>, vector<1x128xf32>
    %61 = vector.broadcast %60 : vector<1x128xf32> to vector<32x128xf32>
    %62 = arith.mulf %59, %61 : vector<32x128xf32>
    %63 = arith.addf %58, %62 : vector<32x128xf32>
    %c31_i32 = arith.constant 31 : i32
    %64 = tpu.dynamic_rotate %27 by %c31_i32 dim 0 : vector<32x128xf32>, i32 -> vector<32x128xf32>
    %cst_21 = arith.constant 0.000000e+00 : f32
    %65 = vector.shape_cast %21 : vector<32x1xi1> to vector<32x1xi1>
    %66 = vector.broadcast %65 : vector<32x1xi1> to vector<32x128xi1>
    %67 = vector.broadcast %cst_21 : f32 to vector<32x128xf32>
    %68 = arith.select %66, %64, %67 : vector<32x128xi1>, vector<32x128xf32>
    %c8_i32_22 = arith.constant 8 : i32
    %69 = tpu.dynamic_rotate %68 by %c8_i32_22 dim 1 : vector<32x128xf32>, i32 -> vector<32x128xf32>
    %c6 = arith.constant 6 : index
    %c0_23 = arith.constant 0 : index
    %70 = vector.load %arg3[%c6, %c0_23] : memref<11x128xf32, #tpu.memory_space<vmem>>, vector<1x128xf32>
    %71 = vector.broadcast %70 : vector<1x128xf32> to vector<32x128xf32>
    %72 = arith.mulf %69, %71 : vector<32x128xf32>
    %73 = arith.addf %63, %72 : vector<32x128xf32>
    %c7 = arith.constant 7 : index
    %c0_24 = arith.constant 0 : index
    %74 = vector.load %arg3[%c7, %c0_24] : memref<11x128xf32, #tpu.memory_space<vmem>>, vector<1x128xf32>
    %75 = vector.broadcast %74 : vector<1x128xf32> to vector<32x128xf32>
    %76 = arith.mulf %68, %75 : vector<32x128xf32>
    %77 = arith.addf %73, %76 : vector<32x128xf32>
    %c120_i32_25 = arith.constant 120 : i32
    %78 = tpu.dynamic_rotate %68 by %c120_i32_25 dim 1 : vector<32x128xf32>, i32 -> vector<32x128xf32>
    %c8 = arith.constant 8 : index
    %c0_26 = arith.constant 0 : index
    %79 = vector.load %arg3[%c8, %c0_26] : memref<11x128xf32, #tpu.memory_space<vmem>>, vector<1x128xf32>
    %80 = vector.broadcast %79 : vector<1x128xf32> to vector<32x128xf32>
    %81 = arith.mulf %78, %80 : vector<32x128xf32>
    %82 = arith.addf %77, %81 : vector<32x128xf32>
    %cst_27 = arith.constant 0.000000e+00 : f32
    %83 = vector.broadcast %cst_27 : f32 to vector<32x128xf32>
    %84 = arith.maximumf %82, %83 : vector<32x128xf32>
    %cst_28 = arith.constant dense<0.000000e+00> : vector<32x256xf32>
    %85 = tpu.matmul %84, %23, %cst_28 {dimension_numbers = #tpu.dot_dimension_numbers<[1], [0], [0], [1], [0, 0, 1, 1], [], []>} : vector<32x128xf32>, vector<128x256xf32>, vector<32x256xf32> -> vector<32x256xf32>
    %c9_29 = arith.constant 9 : index
    %c0_30 = arith.constant 0 : index
    %86 = vector.load %arg4[%c9_29, %c0_30] : memref<11x256xf32, #tpu.memory_space<vmem>>, vector<1x256xf32>
    %87 = vector.broadcast %86 : vector<1x256xf32> to vector<32x256xf32>
    %88 = arith.addf %85, %87 : vector<32x256xf32>
    %c10_31 = arith.constant 10 : index
    %c0_32 = arith.constant 0 : index
    %89 = vector.load %arg4[%c10_31, %c0_32] : memref<11x256xf32, #tpu.memory_space<vmem>>, vector<1x256xf32>
    %90 = vector.shape_cast %89 : vector<1x256xf32> to vector<1x256xf32>
    %91 = vector.broadcast %90 : vector<1x256xf32> to vector<32x256xf32>
    %c1_i32_33 = arith.constant 1 : i32
    %92 = tpu.dynamic_rotate %88 by %c1_i32_33 dim 0 : vector<32x256xf32>, i32 -> vector<32x256xf32>
    %cst_34 = arith.constant 0.000000e+00 : f32
    %93 = vector.shape_cast %19 : vector<32x1xi1> to vector<32x1xi1>
    %94 = vector.broadcast %93 : vector<32x1xi1> to vector<32x256xi1>
    %95 = vector.broadcast %cst_34 : f32 to vector<32x256xf32>
    %96 = arith.select %94, %92, %95 : vector<32x256xi1>, vector<32x256xf32>
    %c16_i32_35 = arith.constant 16 : i32
    %97 = tpu.dynamic_rotate %96 by %c16_i32_35 dim 1 : vector<32x256xf32>, i32 -> vector<32x256xf32>
    %c0_36 = arith.constant 0 : index
    %c0_37 = arith.constant 0 : index
    %98 = vector.load %arg4[%c0_36, %c0_37] : memref<11x256xf32, #tpu.memory_space<vmem>>, vector<1x256xf32>
    %99 = vector.broadcast %98 : vector<1x256xf32> to vector<32x256xf32>
    %100 = arith.mulf %97, %99 : vector<32x256xf32>
    %101 = arith.addf %91, %100 : vector<32x256xf32>
    %c1_38 = arith.constant 1 : index
    %c0_39 = arith.constant 0 : index
    %102 = vector.load %arg4[%c1_38, %c0_39] : memref<11x256xf32, #tpu.memory_space<vmem>>, vector<1x256xf32>
    %103 = vector.broadcast %102 : vector<1x256xf32> to vector<32x256xf32>
    %104 = arith.mulf %96, %103 : vector<32x256xf32>
    %105 = arith.addf %101, %104 : vector<32x256xf32>
    %c240_i32 = arith.constant 240 : i32
    %106 = tpu.dynamic_rotate %96 by %c240_i32 dim 1 : vector<32x256xf32>, i32 -> vector<32x256xf32>
    %c2_40 = arith.constant 2 : index
    %c0_41 = arith.constant 0 : index
    %107 = vector.load %arg4[%c2_40, %c0_41] : memref<11x256xf32, #tpu.memory_space<vmem>>, vector<1x256xf32>
    %108 = vector.broadcast %107 : vector<1x256xf32> to vector<32x256xf32>
    %109 = arith.mulf %106, %108 : vector<32x256xf32>
    %110 = arith.addf %105, %109 : vector<32x256xf32>
    %c16_i32_42 = arith.constant 16 : i32
    %111 = tpu.dynamic_rotate %88 by %c16_i32_42 dim 1 : vector<32x256xf32>, i32 -> vector<32x256xf32>
    %c3_43 = arith.constant 3 : index
    %c0_44 = arith.constant 0 : index
    %112 = vector.load %arg4[%c3_43, %c0_44] : memref<11x256xf32, #tpu.memory_space<vmem>>, vector<1x256xf32>
    %113 = vector.broadcast %112 : vector<1x256xf32> to vector<32x256xf32>
    %114 = arith.mulf %111, %113 : vector<32x256xf32>
    %115 = arith.addf %110, %114 : vector<32x256xf32>
    %c4_45 = arith.constant 4 : index
    %c0_46 = arith.constant 0 : index
    %116 = vector.load %arg4[%c4_45, %c0_46] : memref<11x256xf32, #tpu.memory_space<vmem>>, vector<1x256xf32>
    %117 = vector.broadcast %116 : vector<1x256xf32> to vector<32x256xf32>
    %118 = arith.mulf %88, %117 : vector<32x256xf32>
    %119 = arith.addf %115, %118 : vector<32x256xf32>
    %c240_i32_47 = arith.constant 240 : i32
    %120 = tpu.dynamic_rotate %88 by %c240_i32_47 dim 1 : vector<32x256xf32>, i32 -> vector<32x256xf32>
    %c5_48 = arith.constant 5 : index
    %c0_49 = arith.constant 0 : index
    %121 = vector.load %arg4[%c5_48, %c0_49] : memref<11x256xf32, #tpu.memory_space<vmem>>, vector<1x256xf32>
    %122 = vector.broadcast %121 : vector<1x256xf32> to vector<32x256xf32>
    %123 = arith.mulf %120, %122 : vector<32x256xf32>
    %124 = arith.addf %119, %123 : vector<32x256xf32>
    %c31_i32_50 = arith.constant 31 : i32
    %125 = tpu.dynamic_rotate %88 by %c31_i32_50 dim 0 : vector<32x256xf32>, i32 -> vector<32x256xf32>
    %cst_51 = arith.constant 0.000000e+00 : f32
    %126 = vector.shape_cast %21 : vector<32x1xi1> to vector<32x1xi1>
    %127 = vector.broadcast %126 : vector<32x1xi1> to vector<32x256xi1>
    %128 = vector.broadcast %cst_51 : f32 to vector<32x256xf32>
    %129 = arith.select %127, %125, %128 : vector<32x256xi1>, vector<32x256xf32>
    %c16_i32_52 = arith.constant 16 : i32
    %130 = tpu.dynamic_rotate %129 by %c16_i32_52 dim 1 : vector<32x256xf32>, i32 -> vector<32x256xf32>
    %c6_53 = arith.constant 6 : index
    %c0_54 = arith.constant 0 : index
    %131 = vector.load %arg4[%c6_53, %c0_54] : memref<11x256xf32, #tpu.memory_space<vmem>>, vector<1x256xf32>
    %132 = vector.broadcast %131 : vector<1x256xf32> to vector<32x256xf32>
    %133 = arith.mulf %130, %132 : vector<32x256xf32>
    %134 = arith.addf %124, %133 : vector<32x256xf32>
    %c7_55 = arith.constant 7 : index
    %c0_56 = arith.constant 0 : index
    %135 = vector.load %arg4[%c7_55, %c0_56] : memref<11x256xf32, #tpu.memory_space<vmem>>, vector<1x256xf32>
    %136 = vector.broadcast %135 : vector<1x256xf32> to vector<32x256xf32>
    %137 = arith.mulf %129, %136 : vector<32x256xf32>
    %138 = arith.addf %134, %137 : vector<32x256xf32>
    %c240_i32_57 = arith.constant 240 : i32
    %139 = tpu.dynamic_rotate %129 by %c240_i32_57 dim 1 : vector<32x256xf32>, i32 -> vector<32x256xf32>
    %c8_58 = arith.constant 8 : index
    %c0_59 = arith.constant 0 : index
    %140 = vector.load %arg4[%c8_58, %c0_59] : memref<11x256xf32, #tpu.memory_space<vmem>>, vector<1x256xf32>
    %141 = vector.broadcast %140 : vector<1x256xf32> to vector<32x256xf32>
    %142 = arith.mulf %139, %141 : vector<32x256xf32>
    %143 = arith.addf %138, %142 : vector<32x256xf32>
    %cst_60 = arith.constant 0.000000e+00 : f32
    %144 = vector.broadcast %cst_60 : f32 to vector<32x256xf32>
    %145 = arith.maximumf %143, %144 : vector<32x256xf32>
    %c0_61 = arith.constant 0 : index
    %c0_62 = arith.constant 0 : index
    %146 = vector.load %arg5[%c0_61, %c0_62] : memref<32x256xf32, #tpu.memory_space<vmem>>, vector<32x256xf32>
    tpu.vector_store %arg5[%c0_61, %c0_62], %145 {strides = array<i32>} : memref<32x256xf32, #tpu.memory_space<vmem>>, vector<32x256xf32>,
    return
  }
  func.func @transform_0(%arg0: i32) -> (i32, i32) {
    %c0_i32 = arith.constant 0 : i32
    %c0_i32_0 = arith.constant 0 : i32
    return %arg0, %c0_i32 : i32, i32
  }
  func.func @transform_1(%arg0: i32) -> (i32, i32) {
    %c0_i32 = arith.constant 0 : i32
    %c0_i32_0 = arith.constant 0 : i32
    %c0_i32_1 = arith.constant 0 : i32
    return %c0_i32, %c0_i32_0 : i32, i32
  }
  func.func @transform_2(%arg0: i32) -> (i32, i32) {
    %c0_i32 = arith.constant 0 : i32
    %c0_i32_0 = arith.constant 0 : i32
    %c0_i32_1 = arith.constant 0 : i32
    return %c0_i32, %c0_i32_0 : i32, i32
  }
  func.func @transform_3(%arg0: i32) -> (i32, i32) {
    %c0_i32 = arith.constant 0 : i32
    %c0_i32_0 = arith.constant 0 : i32
    %c0_i32_1 = arith.constant 0 : i32
    return %c0_i32, %c0_i32_0 : i32, i32
  }
  func.func @transform_4(%arg0: i32) -> (i32, i32) {
    %c0_i32 = arith.constant 0 : i32
    %c0_i32_0 = arith.constant 0 : i32
    return %arg0, %c0_i32 : i32, i32
  }
}

</mosaic_0001>

<llo_original>
// kernel: tpu_custom_call.1
$region0: #{tpu_custom_call.1}
  #allocation0 [shape = 'u32[]', space=smem, size = 0x4, offset = 0x4, fixed_abs, tag = 'smem constant byte address 0x4 - core index']
  #allocation1 [shape = 'u32[72,128]{1,0:T(1,128)}', space=vmem, size = 0x9000, scoped, tag = 'internal scratch']
  %s0 = inlined_call_operand.hbm [shape: f32[32,128], index: 0, kind: input, shape index: {}]
  %s1 = inlined_call_operand.hbm [shape: f32[128,384], index: 1, kind: input, shape index: {}]
  %s2 = inlined_call_operand.hbm [shape: f32[11,128], index: 2, kind: input, shape index: {}]
  %s3 = inlined_call_operand.hbm [shape: f32[11,256], index: 3, kind: input, shape index: {}]
  %s4 = inlined_call_operand.hbm [shape: f32[32,256], index: 4, kind: output, shape index: {}]
  %s5 = sld [smem:[#allocation0]]
  $region42: #{tpu_custom_call.1} parent=0
    _
  %s7 = ssub.s32 1, %s5
  %s8 = scalar_select 0, %s7, %s5
  $region1: #{tpu_custom_call.1} parent=0
    #allocation2 [shape = 'u8[16384]{0}', space=vmem, size = 0x4000, scoped, tag = 'input window, operand 0, single buffered']
    #allocation3 [shape = 's32[1]{0}', space=sflag, size = 0x4, scoped, tag = 'scoped memory for tpu_custom_call.1']
    #allocation4 [shape = 's32[1]{0}', space=sflag, size = 0x4, scoped, tag = 'scoped memory for tpu_custom_call.1']
    #allocation5 [shape = 'u8[196608]{0}', space=vmem, size = 0x30000, scoped, tag = 'input window, operand 1, single buffered']
    #allocation6 [shape = 's32[1]{0}', space=sflag, size = 0x4, scoped, tag = 'scoped memory for tpu_custom_call.1']
    #allocation7 [shape = 'u8[8192]{0}', space=vmem, size = 0x2000, scoped, tag = 'input window, operand 2, single buffered']
    #allocation8 [shape = 'u8[16384]{0}', space=vmem, size = 0x4000, scoped, tag = 'input window, operand 3, single buffered']
    #allocation9 [shape = 's32[1]{0}', space=sflag, size = 0x4, scoped, tag = 'scoped memory for tpu_custom_call.1']
    #allocation10 [shape = 'u8[32768]{0}', space=vmem, size = 0x8000, scoped, tag = 'output window, operand 0, single buffered']
    %9 = vsyncpa [#allocation3], 0
    %10 = vsyncpa [#allocation6], 0
    %11 = vsyncpa [#allocation9], 0
    %12 = vsyncpa [#allocation4], 0
    // Predicated region
    $region2: #{tpu_custom_call.1} parent=1 // pred_check
      _
    $region3: #{tpu_custom_call.1} parent=1 // pred_check_branch
      %14 = sbr.rel (0) target = $region5
    $region4: #{tpu_custom_call.1} parent=1 // pred_region
      %16 = vsyncadd [#allocation3], 0
      %s17 = sshll.u32 %s0, 4
      %s18 = int_to_ptr.hbm [resolvable:$true] %s17
      %s19 = sshll.u32 [#allocation2], 4
      %s20 = int_to_ptr.vmem [resolvable:$true] %s19
      %25 = dma.hbm_to_vmem [thread:$0]  %s18, 512, %s20, [#allocation3], 128, 128, 8
    $region5: #{tpu_custom_call.1} parent=1 // pred_fallthru
      _
    // Predicated region
    $region6: #{tpu_custom_call.1} parent=1 // pred_check
      _
    $region7: #{tpu_custom_call.1} parent=1 // pred_check_branch
      %27 = sbr.rel (0) target = $region9
    $region8: #{tpu_custom_call.1} parent=1 // pred_region
      %29 = vsyncadd [#allocation6], 0
      %s30 = sshll.u32 %s1, 4
      %s31 = int_to_ptr.hbm [resolvable:$true] %s30
      %s32 = sshll.u32 [#allocation5], 4
      %s33 = int_to_ptr.vmem [resolvable:$true] %s32
      %38 = dma.hbm_to_vmem [thread:$0]  %s31, 6144, %s33, [#allocation6], 384, 384, 24
    $region9: #{tpu_custom_call.1} parent=1 // pred_fallthru
      _
    // Predicated region
    $region10: #{tpu_custom_call.1} parent=1 // pred_check
      _
    $region11: #{tpu_custom_call.1} parent=1 // pred_check_branch
      %40 = sbr.rel (0) target = $region13
    $region12: #{tpu_custom_call.1} parent=1 // pred_region
      %42 = vsyncadd [#allocation6], 0
      %s43 = sshll.u32 %s2, 4
      %s44 = int_to_ptr.hbm [resolvable:$true] %s43
      %s45 = sshll.u32 [#allocation7], 4
      %s46 = int_to_ptr.vmem [resolvable:$true] %s45
      %51 = dma.hbm_to_vmem [thread:$0]  %s44, 256, %s46, [#allocation6], 128, 128, 8
    $region13: #{tpu_custom_call.1} parent=1 // pred_fallthru
      _
    // Predicated region
    $region14: #{tpu_custom_call.1} parent=1 // pred_check
      _
    $region15: #{tpu_custom_call.1} parent=1 // pred_check_branch
      %53 = sbr.rel (0) target = $region17
    $region16: #{tpu_custom_call.1} parent=1 // pred_region
      %55 = vsyncadd [#allocation9], 0
      %s56 = sshll.u32 %s3, 4
      %s57 = int_to_ptr.hbm [resolvable:$true] %s56
      %s58 = sshll.u32 [#allocation8], 4
      %s59 = int_to_ptr.vmem [resolvable:$true] %s58
      %64 = dma.hbm_to_vmem [thread:$0]  %s57, 512, %s59, [#allocation9], 256, 256, 16
    $region17: #{tpu_custom_call.1} parent=1 // pred_fallthru
      _
    // Predicated region
    $region18: #{tpu_custom_call.1} parent=1 // pred_check
      _
    $region19: #{tpu_custom_call.1} parent=1 // pred_check_branch
      %66 = sbr.rel (0) target = $region21
    $region20: #{tpu_custom_call.1} parent=1 // pred_region
      %68 = dma.done [#allocation3], 512
    $region21: #{tpu_custom_call.1} parent=1 // pred_fallthru
      _
    // Predicated region
    $region22: #{tpu_custom_call.1} parent=1 // pred_check
      _
    $region23: #{tpu_custom_call.1} parent=1 // pred_check_branch
      %70 = sbr.rel (0) target = $region25
    $region24: #{tpu_custom_call.1} parent=1 // pred_region
      %72 = dma.done [#allocation6], 6144
    $region25: #{tpu_custom_call.1} parent=1 // pred_fallthru
      _
    // Predicated region
    $region26: #{tpu_custom_call.1} parent=1 // pred_check
      _
    $region27: #{tpu_custom_call.1} parent=1 // pred_check_branch
      %74 = sbr.rel (0) target = $region29
    $region28: #{tpu_custom_call.1} parent=1 // pred_region
      %76 = dma.done [#allocation6], 256
    $region29: #{tpu_custom_call.1} parent=1 // pred_fallthru
      _
    // Predicated region
    $region30: #{tpu_custom_call.1} parent=1 // pred_check
      _
    $region31: #{tpu_custom_call.1} parent=1 // pred_check_branch
      %78 = sbr.rel (0) target = $region33
    $region32: #{tpu_custom_call.1} parent=1 // pred_region
      %80 = dma.done [#allocation9], 512
    $region33: #{tpu_custom_call.1} parent=1 // pred_fallthru
      _
    %v81 = vld [vmem:[#allocation2] sm:$0xff]
    %v82 = vld [vmem:[#allocation2 + $0x8] sm:$0xff]
    %v83 = vld [vmem:[#allocation2 + $0x10] sm:$0xff]
    %v84 = vld [vmem:[#allocation2 + $0x18] sm:$0xff]
    %v85 = vlaneseq
    %v86 = vshrl.u32 %v85, 7
    %v87 = vadd.s32 %v86, 8
    %v88 = vadd.s32 %v86, 16
    %v89 = vadd.s32 %v86, 24
    %vm90 = vcmp.lt.s32.totalorder %v86, 0
    %v91 = vsub.s32 0, %v86
    %v92 = vsel %vm90, %v91, %v86
    %v93 = vshrl.u32 %v92, 4
    %v94 = vand.u32 %v92, 15
    %v95 = vsub.s32 0, %v94
    %v96 = vsel %vm90, %v95, %v94
    %vm97 = vcmp.lt.s32.totalorder %v87, 0
    %v98 = vsub.s32 0, %v87
    %v99 = vsel %vm97, %v98, %v87
    %v100 = vshrl.u32 %v99, 4
    %v101 = vand.u32 %v99, 15
    %v102 = vsub.s32 0, %v101
    %v103 = vsel %vm97, %v102, %v101
    %vm104 = vcmp.lt.s32.totalorder %v88, 0
    %v105 = vsub.s32 0, %v88
    %v106 = vsel %vm104, %v105, %v88
    %v107 = vshrl.u32 %v106, 4
    %v108 = vand.u32 %v106, 15
    %v109 = vsub.s32 0, %v108
    %v110 = vsel %vm104, %v109, %v108
    %vm111 = vcmp.lt.s32.totalorder %v89, 0
    %v112 = vsub.s32 0, %v89
    %v113 = vsel %vm111, %v112, %v89
    %v114 = vshrl.u32 %v113, 4
    %v115 = vand.u32 %v113, 15
    %v116 = vsub.s32 0, %v115
    %v117 = vsel %vm111, %v116, %v115
    %vm118 = vcmp.ne.s32.totalorder %v96, 0
    %vm119 = vcmp.ne.s32.totalorder %v103, 0
    %vm120 = vcmp.ne.s32.totalorder %v110, 0
    %vm121 = vcmp.ne.s32.totalorder %v117, 0
    %vm122 = vcmp.lt.s32.totalorder %v96, 0
    %vm123 = vcmp.lt.s32.totalorder %v103, 0
    %vm124 = vcmp.lt.s32.totalorder %v110, 0
    %vm125 = vcmp.lt.s32.totalorder %v117, 0
    %vm126 = vmand %vm122, %vm118
    %vm127 = vmand %vm123, %vm119
    %vm128 = vmand %vm124, %vm120
    %vm129 = vmand %vm125, %vm121
    %v130 = vadd.s32 %v96, 16
    %v131 = vadd.s32 %v103, 16
    %v132 = vadd.s32 %v110, 16
    %v133 = vadd.s32 %v117, 16
    %v134 = vsel %vm126, %v130, %v96
    %v135 = vsel %vm127, %v131, %v103
    %v136 = vsel %vm128, %v132, %v110
    %v137 = vsel %vm129, %v133, %v117
    %vm138 = vcmp.gt.s32.totalorder %v134, 0
    %vm139 = vcmp.gt.s32.totalorder %v135, 0
    %vm140 = vcmp.gt.s32.totalorder %v136, 0
    %vm141 = vcmp.gt.s32.totalorder %v137, 0
    %vm142 = vcmp.lt.s32.totalorder %v134, 15
    %vm143 = vcmp.lt.s32.totalorder %v135, 15
    %vm144 = vcmp.lt.s32.totalorder %v136, 15
    %vm145 = vcmp.lt.s32.totalorder %v137, 15
    %v146 = vld [vmem:[#allocation5] sm:$0xff]
    %v147 = vld [vmem:[#allocation5 + $0x18] sm:$0xff]
    %v148 = vld [vmem:[#allocation5 + $0x30] sm:$0xff]
    %v149 = vld [vmem:[#allocation5 + $0x48] sm:$0xff]
    %v150 = vld [vmem:[#allocation5 + $0x60] sm:$0xff]
    %v151 = vld [vmem:[#allocation5 + $0x78] sm:$0xff]
    %v152 = vld [vmem:[#allocation5 + $0x90] sm:$0xff]
    %v153 = vld [vmem:[#allocation5 + $0xa8] sm:$0xff]
    %v154 = vld [vmem:[#allocation5 + $0xc0] sm:$0xff]
    %v155 = vld [vmem:[#allocation5 + $0xd8] sm:$0xff]
    %v156 = vld [vmem:[#allocation5 + $0xf0] sm:$0xff]
    %v157 = vld [vmem:[#allocation5 + $0x108] sm:$0xff]
    %v158 = vld [vmem:[#allocation5 + $0x120] sm:$0xff]
    %v159 = vld [vmem:[#allocation5 + $0x138] sm:$0xff]
    %v160 = vld [vmem:[#allocation5 + $0x150] sm:$0xff]
    %v161 = vld [vmem:[#allocation5 + $0x168] sm:$0xff]
    %v162 = vld [vmem:[#allocation5 + $0x8] sm:$0xff]
    %v163 = vld [vmem:[#allocation5 + $0x10] sm:$0xff]
    %v164 = vld [vmem:[#allocation5 + $0x20] sm:$0xff]
    %v165 = vld [vmem:[#allocation5 + $0x28] sm:$0xff]
    %v166 = vld [vmem:[#allocation5 + $0x38] sm:$0xff]
    %v167 = vld [vmem:[#allocation5 + $0x40] sm:$0xff]
    %v168 = vld [vmem:[#allocation5 + $0x50] sm:$0xff]
    %v169 = vld [vmem:[#allocation5 + $0x58] sm:$0xff]
    %v170 = vld [vmem:[#allocation5 + $0x68] sm:$0xff]
    %v171 = vld [vmem:[#allocation5 + $0x70] sm:$0xff]
    %v172 = vld [vmem:[#allocation5 + $0x80] sm:$0xff]
    %v173 = vld [vmem:[#allocation5 + $0x88] sm:$0xff]
    %v174 = vld [vmem:[#allocation5 + $0x98] sm:$0xff]
    %v175 = vld [vmem:[#allocation5 + $0xa0] sm:$0xff]
    %v176 = vld [vmem:[#allocation5 + $0xb0] sm:$0xff]
    %v177 = vld [vmem:[#allocation5 + $0xb8] sm:$0xff]
    %v178 = vld [vmem:[#allocation5 + $0xc8] sm:$0xff]
    %v179 = vld [vmem:[#allocation5 + $0xd0] sm:$0xff]
    %v180 = vld [vmem:[#allocation5 + $0xe0] sm:$0xff]
    %v181 = vld [vmem:[#allocation5 + $0xe8] sm:$0xff]
    %v182 = vld [vmem:[#allocation5 + $0xf8] sm:$0xff]
    %v183 = vld [vmem:[#allocation5 + $0x100] sm:$0xff]
    %v184 = vld [vmem:[#allocation5 + $0x110] sm:$0xff]
    %v185 = vld [vmem:[#allocation5 + $0x118] sm:$0xff]
    %v186 = vld [vmem:[#allocation5 + $0x128] sm:$0xff]
    %v187 = vld [vmem:[#allocation5 + $0x130] sm:$0xff]
    %v188 = vld [vmem:[#allocation5 + $0x140] sm:$0xff]
    %v189 = vld [vmem:[#allocation5 + $0x148] sm:$0xff]
    %v190 = vld [vmem:[#allocation5 + $0x158] sm:$0xff]
    %v191 = vld [vmem:[#allocation5 + $0x160] sm:$0xff]
    %v192 = vld [vmem:[#allocation5 + $0x170] sm:$0xff]
    %v193 = vld [vmem:[#allocation5 + $0x178] sm:$0xff]
    %v194 = vld [vmem:[#allocation7 + $0x9] sm:$0x1]
    %v195 = vperm.slane %v194, 0
    %196 = vmatpush.msra.mxu0 %v161
    %197 = vmatpush.msra.mxu0 %v160
    %198 = vmatpush.msra.mxu0 %v159
    %199 = vmatpush.msra.mxu0 %v158
    %200 = vmatpush.msra.mxu0 %v157
    %201 = vmatpush.msra.mxu0 %v156
    %202 = vmatpush.msra.mxu0 %v155
    %203 = vmatpush.msra.mxu0 %v154
    %204 = vmatpush.msra.mxu0 %v153
    %205 = vmatpush.msra.mxu0 %v152
    %206 = vmatpush.msra.mxu0 %v151
    %207 = vmatpush.msra.mxu0 %v150
    %208 = vmatpush.msra.mxu0 %v149
    %209 = vmatpush.msra.mxu0 %v148
    %210 = vmatpush.msra.mxu0 %v147
    %211 = vmatpush.msra.mxu0 %v146
    %212 = vmatmul.f32.gmra.mxu0 %v81
    %v213 = vpop.f32.mrf.mxu0
    %v214 = vadd.f32 %v195, %v213
    %215 = vmatmul.f32.gmra.mxu0 %v82
    %v216 = vpop.f32.mrf.mxu0
    %v217 = vadd.f32 %v195, %v216
    %218 = vmatmul.f32.gmra.mxu0 %v83
    %v219 = vpop.f32.mrf.mxu0
    %v220 = vadd.f32 %v195, %v219
    %221 = vmatmul.f32.gmra.mxu0 %v84
    %v222 = vpop.f32.mrf.mxu0
    %v223 = vadd.f32 %v195, %v222
    %224 = vdwg.mxu0
    %v225 = vld [vmem:[#allocation7 + $0xa] sm:$0x1]
    %v226 = vperm.slane %v225, 0
    %v227 = vrot.slane %v214, 7
    %v228 = vrot.slane %v217, 7
    %v229 = vrot.slane %v220, 7
    %v230 = vrot.slane %v223, 7
    %vm231 = vcmp.lt.s32.totalorder %v86, 1
    %v232 = vsel %vm231, %v229, %v230
    %v233 = vsel %vm231, %v228, %v229
    %v234 = vsel %vm231, %v227, %v228
    %v235 = vsel %vm231, %v230, %v227
    %v236 = vsel %vm138, 1, 0
    %v237 = vsel %vm139, 1, 0
    %v238 = vsel %vm140, 1, 0
    %v239 = vsel %vm141, 1, 0
    %vm240 = vcmp.eq.s32.totalorder %v236, 1
    %vm241 = vcmp.eq.s32.totalorder %v237, 1
    %vm242 = vcmp.eq.s32.totalorder %v238, 1
    %vm243 = vcmp.eq.s32.totalorder %v239, 1
    %v244 = vsel %vm240, %v235, 0.0
    %v245 = vsel %vm241, %v234, 0.0
    %v246 = vsel %vm242, %v233, 0.0
    %v247 = vsel %vm243, %v232, 0.0
    %248 = vrot.lane.b32.xlu0 %v244, 8
    %v249 = vpop.permute.xlu0 %248
    %250 = vrot.lane.b32.xlu0 %v245, 8
    %v251 = vpop.permute.xlu0 %250
    %252 = vrot.lane.b32.xlu0 %v246, 8
    %v253 = vpop.permute.xlu0 %252
    %254 = vrot.lane.b32.xlu0 %v247, 8
    %v255 = vpop.permute.xlu0 %254
    %v256 = vld [vmem:[#allocation7] sm:$0x1]
    %v257 = vperm.slane %v256, 0
    %v258 = vmul.f32 %v249, %v257
    %v259 = vmul.f32 %v251, %v257
    %v260 = vmul.f32 %v253, %v257
    %v261 = vmul.f32 %v255, %v257
    %v262 = vadd.f32 %v226, %v258
    %v263 = vadd.f32 %v226, %v259
    %v264 = vadd.f32 %v226, %v260
    %v265 = vadd.f32 %v226, %v261
    %v266 = vld [vmem:[#allocation7 + $0x1] sm:$0x1]
    %v267 = vperm.slane %v266, 0
    %v268 = vmul.f32 %v244, %v267
    %v269 = vmul.f32 %v245, %v267
    %v270 = vmul.f32 %v246, %v267
    %v271 = vmul.f32 %v247, %v267
    %v272 = vadd.f32 %v262, %v268
    %v273 = vadd.f32 %v263, %v269
    %v274 = vadd.f32 %v264, %v270
    %v275 = vadd.f32 %v265, %v271
    %276 = vrot.lane.b32.xlu0 %v244, 120
    %v277 = vpop.permute.xlu0 %276
    %278 = vrot.lane.b32.xlu0 %v245, 120
    %v279 = vpop.permute.xlu0 %278
    %280 = vrot.lane.b32.xlu0 %v246, 120
    %v281 = vpop.permute.xlu0 %280
    %282 = vrot.lane.b32.xlu0 %v247, 120
    %v283 = vpop.permute.xlu0 %282
    %v284 = vld [vmem:[#allocation7 + $0x2] sm:$0x1]
    %v285 = vperm.slane %v284, 0
    %v286 = vmul.f32 %v277, %v285
    %v287 = vmul.f32 %v279, %v285
    %v288 = vmul.f32 %v281, %v285
    %v289 = vmul.f32 %v283, %v285
    %v290 = vadd.f32 %v272, %v286
    %v291 = vadd.f32 %v273, %v287
    %v292 = vadd.f32 %v274, %v288
    %v293 = vadd.f32 %v275, %v289
    %294 = vrot.lane.b32.xlu0 %v214, 8
    %v295 = vpop.permute.xlu0 %294
    %296 = vrot.lane.b32.xlu0 %v217, 8
    %v297 = vpop.permute.xlu0 %296
    %298 = vrot.lane.b32.xlu0 %v220, 8
    %v299 = vpop.permute.xlu0 %298
    %300 = vrot.lane.b32.xlu0 %v223, 8
    %v301 = vpop.permute.xlu0 %300
    %v302 = vld [vmem:[#allocation7 + $0x3] sm:$0x1]
    %v303 = vperm.slane %v302, 0
    %v304 = vmul.f32 %v295, %v303
    %v305 = vmul.f32 %v297, %v303
    %v306 = vmul.f32 %v299, %v303
    %v307 = vmul.f32 %v301, %v303
    %v308 = vadd.f32 %v290, %v304
    %v309 = vadd.f32 %v291, %v305
    %v310 = vadd.f32 %v292, %v306
    %v311 = vadd.f32 %v293, %v307
    %v312 = vld [vmem:[#allocation7 + $0x4] sm:$0x1]
    %v313 = vperm.slane %v312, 0
    %v314 = vmul.f32 %v214, %v313
    %v315 = vmul.f32 %v217, %v313
    %v316 = vmul.f32 %v220, %v313
    %v317 = vmul.f32 %v223, %v313
    %v318 = vadd.f32 %v308, %v314
    %v319 = vadd.f32 %v309, %v315
    %v320 = vadd.f32 %v310, %v316
    %v321 = vadd.f32 %v311, %v317
    %322 = vrot.lane.b32.xlu0 %v214, 120
    %v323 = vpop.permute.xlu0 %322
    %324 = vrot.lane.b32.xlu0 %v217, 120
    %v325 = vpop.permute.xlu0 %324
    %326 = vrot.lane.b32.xlu0 %v220, 120
    %v327 = vpop.permute.xlu0 %326
    %328 = vrot.lane.b32.xlu0 %v223, 120
    %v329 = vpop.permute.xlu0 %328
    %v330 = vld [vmem:[#allocation7 + $0x5] sm:$0x1]
    %v331 = vperm.slane %v330, 0
    %v332 = vmul.f32 %v323, %v331
    %v333 = vmul.f32 %v325, %v331
    %v334 = vmul.f32 %v327, %v331
    %v335 = vmul.f32 %v329, %v331
    %v336 = vadd.f32 %v318, %v332
    %v337 = vadd.f32 %v319, %v333
    %v338 = vadd.f32 %v320, %v334
    %v339 = vadd.f32 %v321, %v335
    %v340 = vrot.slane %v214, 1
    %v341 = vrot.slane %v217, 1
    %v342 = vrot.slane %v220, 1
    %v343 = vrot.slane %v223, 1
    %vm344 = vcmp.lt.s32.totalorder %v86, 7
    %v345 = vsel %vm344, %v342, %v343
    %v346 = vsel %vm344, %v341, %v342
    %v347 = vsel %vm344, %v340, %v341
    %v348 = vsel %vm344, %v343, %v340
    %v349 = vsel %vm142, 1, 0
    %v350 = vsel %vm143, 1, 0
    %v351 = vsel %vm144, 1, 0
    %v352 = vsel %vm145, 1, 0
    %vm353 = vcmp.eq.s32.totalorder %v349, 1
    %vm354 = vcmp.eq.s32.totalorder %v350, 1
    %vm355 = vcmp.eq.s32.totalorder %v351, 1
    %vm356 = vcmp.eq.s32.totalorder %v352, 1
    %v357 = vsel %vm353, %v347, 0.0
    %v358 = vsel %vm354, %v346, 0.0
    %v359 = vsel %vm355, %v345, 0.0
    %v360 = vsel %vm356, %v348, 0.0
    %361 = vrot.lane.b32.xlu0 %v357, 8
    %v362 = vpop.permute.xlu0 %361
    %363 = vrot.lane.b32.xlu0 %v358, 8
    %v364 = vpop.permute.xlu0 %363
    %365 = vrot.lane.b32.xlu0 %v359, 8
    %v366 = vpop.permute.xlu0 %365
    %367 = vrot.lane.b32.xlu0 %v360, 8
    %v368 = vpop.permute.xlu0 %367
    %v369 = vld [vmem:[#allocation7 + $0x6] sm:$0x1]
    %v370 = vperm.slane %v369, 0
    %v371 = vmul.f32 %v362, %v370
    %v372 = vmul.f32 %v364, %v370
    %v373 = vmul.f32 %v366, %v370
    %v374 = vmul.f32 %v368, %v370
    %v375 = vadd.f32 %v336, %v371
    %v376 = vadd.f32 %v337, %v372
    %v377 = vadd.f32 %v338, %v373
    %v378 = vadd.f32 %v339, %v374
    %v379 = vld [vmem:[#allocation7 + $0x7] sm:$0x1]
    %v380 = vperm.slane %v379, 0
    %v381 = vmul.f32 %v357, %v380
    %v382 = vmul.f32 %v358, %v380
    %v383 = vmul.f32 %v359, %v380
    %v384 = vmul.f32 %v360, %v380
    %v385 = vadd.f32 %v375, %v381
    %v386 = vadd.f32 %v376, %v382
    %v387 = vadd.f32 %v377, %v383
    %v388 = vadd.f32 %v378, %v384
    %389 = vrot.lane.b32.xlu0 %v357, 120
    %v390 = vpop.permute.xlu0 %389
    %391 = vrot.lane.b32.xlu0 %v358, 120
    %v392 = vpop.permute.xlu0 %391
    %393 = vrot.lane.b32.xlu0 %v359, 120
    %v394 = vpop.permute.xlu0 %393
    %395 = vrot.lane.b32.xlu0 %v360, 120
    %v396 = vpop.permute.xlu0 %395
    %v397 = vld [vmem:[#allocation7 + $0x8] sm:$0x1]
    %v398 = vperm.slane %v397, 0
    %v399 = vmul.f32 %v390, %v398
    %v400 = vmul.f32 %v392, %v398
    %v401 = vmul.f32 %v394, %v398
    %v402 = vmul.f32 %v396, %v398
    %v403 = vadd.f32 %v385, %v399
    %v404 = vadd.f32 %v386, %v400
    %v405 = vadd.f32 %v387, %v401
    %v406 = vadd.f32 %v388, %v402
    %v407 = vmax.f32 %v403, 0.0
    %v408 = vmax.f32 %v404, 0.0
    %v409 = vmax.f32 %v405, 0.0
    %v410 = vmax.f32 %v406, 0.0
    %s411 = scalar_lea.vmem [#allocation8], 17
    %v412 = vld [vmem:[%s411] ss:$8 sm:$0x3]
    %v414 = vperm.slane %v412, 0
    %v415 = vperm.slane %v412, 1
    %418 = vmatpush.msra.mxu0 %v192
    %419 = vmatpush.msra.mxu0 %v190
    %420 = vmatpush.msra.mxu0 %v188
    %421 = vmatpush.msra.mxu0 %v186
    %422 = vmatpush.msra.mxu0 %v184
    %423 = vmatpush.msra.mxu0 %v182
    %424 = vmatpush.msra.mxu0 %v180
    %425 = vmatpush.msra.mxu0 %v178
    %426 = vmatpush.msra.mxu0 %v176
    %427 = vmatpush.msra.mxu0 %v174
    %428 = vmatpush.msra.mxu0 %v172
    %429 = vmatpush.msra.mxu0 %v170
    %430 = vmatpush.msra.mxu0 %v168
    %431 = vmatpush.msra.mxu0 %v166
    %432 = vmatpush.msra.mxu0 %v164
    %433 = vmatpush.msra.mxu0 %v162
    %434 = vmatmul.f32.gmra.mxu0 %v407
    %v435 = vpop.f32.mrf.mxu0
    %v436 = vadd.f32 %v414, %v435
    %437 = vmatmul.f32.gmra.mxu0 %v408
    %v438 = vpop.f32.mrf.mxu0
    %v439 = vadd.f32 %v414, %v438
    %440 = vmatmul.f32.gmra.mxu0 %v409
    %v441 = vpop.f32.mrf.mxu0
    %v442 = vadd.f32 %v414, %v441
    %443 = vmatmul.f32.gmra.mxu0 %v410
    %v444 = vpop.f32.mrf.mxu0
    %v445 = vadd.f32 %v414, %v444
    %446 = vdwg.mxu0
    %447 = vmatpush.msra.mxu0 %v193
    %448 = vmatpush.msra.mxu0 %v191
    %449 = vmatpush.msra.mxu0 %v189
    %450 = vmatpush.msra.mxu0 %v187
    %451 = vmatpush.msra.mxu0 %v185
    %452 = vmatpush.msra.mxu0 %v183
    %453 = vmatpush.msra.mxu0 %v181
    %454 = vmatpush.msra.mxu0 %v179
    %455 = vmatpush.msra.mxu0 %v177
    %456 = vmatpush.msra.mxu0 %v175
    %457 = vmatpush.msra.mxu0 %v173
    %458 = vmatpush.msra.mxu0 %v171
    %459 = vmatpush.msra.mxu0 %v169
    %460 = vmatpush.msra.mxu0 %v167
    %461 = vmatpush.msra.mxu0 %v165
    %462 = vmatpush.msra.mxu0 %v163
    %463 = vmatmul.f32.gmra.mxu0 %v407
    %v464 = vpop.f32.mrf.mxu0
    %v465 = vadd.f32 %v415, %v464
    %466 = vmatmul.f32.gmra.mxu0 %v408
    %v467 = vpop.f32.mrf.mxu0
    %v468 = vadd.f32 %v415, %v467
    %469 = vmatmul.f32.gmra.mxu0 %v409
    %v470 = vpop.f32.mrf.mxu0
    %v471 = vadd.f32 %v415, %v470
    %472 = vmatmul.f32.gmra.mxu0 %v410
    %v473 = vpop.f32.mrf.mxu0
    %v474 = vadd.f32 %v415, %v473
    %475 = vdwg.mxu0
    %s476 = scalar_lea.vmem [#allocation8], 18
    %v477 = vld [vmem:[%s476] ss:$8 sm:$0x3]
    %v479 = vperm.slane %v477, 0
    %v480 = vperm.slane %v477, 1
    %v483 = vrot.slane %v436, 7
    %v484 = vrot.slane %v465, 7
    %v485 = vrot.slane %v439, 7
    %v486 = vrot.slane %v468, 7
    %v487 = vrot.slane %v442, 7
    %v488 = vrot.slane %v471, 7
    %v489 = vrot.slane %v445, 7
    %v490 = vrot.slane %v474, 7
    %v491 = vsel %vm231, %v487, %v489
    %v492 = vsel %vm231, %v488, %v490
    %v493 = vsel %vm231, %v485, %v487
    %v494 = vsel %vm231, %v486, %v488
    %v495 = vsel %vm231, %v483, %v485
    %v496 = vsel %vm231, %v484, %v486
    %v497 = vsel %vm231, %v489, %v483
    %v498 = vsel %vm231, %v490, %v484
    %v499 = vsel %vm240, %v497, 0.0
    %v500 = vsel %vm240, %v498, 0.0
    %v501 = vsel %vm241, %v495, 0.0
    %v502 = vsel %vm241, %v496, 0.0
    %v503 = vsel %vm242, %v493, 0.0
    %v504 = vsel %vm242, %v494, 0.0
    %v505 = vsel %vm243, %v491, 0.0
    %v506 = vsel %vm243, %v492, 0.0
    %507 = vrot.lane.b32.xlu0 %v499, 16
    %v508 = vpop.permute.xlu0 %507
    %509 = vrot.lane.b32.xlu0 %v501, 16
    %v510 = vpop.permute.xlu0 %509
    %511 = vrot.lane.b32.xlu0 %v503, 16
    %v512 = vpop.permute.xlu0 %511
    %513 = vrot.lane.b32.xlu0 %v505, 16
    %v514 = vpop.permute.xlu0 %513
    %515 = vrot.lane.b32.xlu0 %v500, 16
    %v516 = vpop.permute.xlu0 %515
    %517 = vrot.lane.b32.xlu0 %v502, 16
    %v518 = vpop.permute.xlu0 %517
    %519 = vrot.lane.b32.xlu0 %v504, 16
    %v520 = vpop.permute.xlu0 %519
    %521 = vrot.lane.b32.xlu0 %v506, 16
    %v522 = vpop.permute.xlu0 %521
    %v523 = vlaneseq
    %v524 = vand.u32 %v523, 127
    %vm525 = vcmp.lt.s32.totalorder %v524, 16
    %v526 = vsel %vm525, %v508, %v516
    %v527 = vsel %vm525, %v510, %v518
    %v528 = vsel %vm525, %v512, %v520
    %v529 = vsel %vm525, %v514, %v522
    %v530 = vsel %vm525, %v516, %v508
    %v531 = vsel %vm525, %v518, %v510
    %v532 = vsel %vm525, %v520, %v512
    %v533 = vsel %vm525, %v522, %v514
    %v534 = vld [vmem:[#allocation8] ss:$8 sm:$0x3]
    %v536 = vperm.slane %v534, 0
    %v537 = vperm.slane %v534, 1
    %v540 = vmul.f32 %v530, %v536
    %v541 = vmul.f32 %v526, %v537
    %v542 = vmul.f32 %v531, %v536
    %v543 = vmul.f32 %v527, %v537
    %v544 = vmul.f32 %v532, %v536
    %v545 = vmul.f32 %v528, %v537
    %v546 = vmul.f32 %v533, %v536
    %v547 = vmul.f32 %v529, %v537
    %v548 = vadd.f32 %v479, %v540
    %v549 = vadd.f32 %v480, %v541
    %v550 = vadd.f32 %v479, %v542
    %v551 = vadd.f32 %v480, %v543
    %v552 = vadd.f32 %v479, %v544
    %v553 = vadd.f32 %v480, %v545
    %v554 = vadd.f32 %v479, %v546
    %v555 = vadd.f32 %v480, %v547
    %s556 = scalar_lea.vmem [#allocation8], 1
    %v557 = vld [vmem:[%s556] ss:$8 sm:$0x3]
    %v559 = vperm.slane %v557, 0
    %v560 = vperm.slane %v557, 1
    %v563 = vmul.f32 %v499, %v559
    %v564 = vmul.f32 %v500, %v560
    %v565 = vmul.f32 %v501, %v559
    %v566 = vmul.f32 %v502, %v560
    %v567 = vmul.f32 %v503, %v559
    %v568 = vmul.f32 %v504, %v560
    %v569 = vmul.f32 %v505, %v559
    %v570 = vmul.f32 %v506, %v560
    %v571 = vadd.f32 %v548, %v563
    %v572 = vadd.f32 %v549, %v564
    %v573 = vadd.f32 %v550, %v565
    %v574 = vadd.f32 %v551, %v566
    %v575 = vadd.f32 %v552, %v567
    %v576 = vadd.f32 %v553, %v568
    %v577 = vadd.f32 %v554, %v569
    %v578 = vadd.f32 %v555, %v570
    %579 = vrot.lane.b32.xlu0 %v499, 112
    %v580 = vpop.permute.xlu0 %579
    %581 = vrot.lane.b32.xlu0 %v501, 112
    %v582 = vpop.permute.xlu0 %581
    %583 = vrot.lane.b32.xlu0 %v503, 112
    %v584 = vpop.permute.xlu0 %583
    %585 = vrot.lane.b32.xlu0 %v505, 112
    %v586 = vpop.permute.xlu0 %585
    %587 = vrot.lane.b32.xlu0 %v500, 112
    %v588 = vpop.permute.xlu0 %587
    %589 = vrot.lane.b32.xlu0 %v502, 112
    %v590 = vpop.permute.xlu0 %589
    %591 = vrot.lane.b32.xlu0 %v504, 112
    %v592 = vpop.permute.xlu0 %591
    %593 = vrot.lane.b32.xlu0 %v506, 112
    %v594 = vpop.permute.xlu0 %593
    %vm595 = vcmp.lt.s32.totalorder %v524, 112
    %v596 = vsel %vm595, %v580, %v588
    %v597 = vsel %vm595, %v582, %v590
    %v598 = vsel %vm595, %v584, %v592
    %v599 = vsel %vm595, %v586, %v594
    %v600 = vsel %vm595, %v588, %v580
    %v601 = vsel %vm595, %v590, %v582
    %v602 = vsel %vm595, %v592, %v584
    %v603 = vsel %vm595, %v594, %v586
    %s604 = scalar_lea.vmem [#allocation8], 2
    %v605 = vld [vmem:[%s604] ss:$8 sm:$0x3]
    %v607 = vperm.slane %v605, 0
    %v608 = vperm.slane %v605, 1
    %v611 = vmul.f32 %v596, %v607
    %v612 = vmul.f32 %v600, %v608
    %v613 = vmul.f32 %v597, %v607
    %v614 = vmul.f32 %v601, %v608
    %v615 = vmul.f32 %v598, %v607
    %v616 = vmul.f32 %v602, %v608
    %v617 = vmul.f32 %v599, %v607
    %v618 = vmul.f32 %v603, %v608
    %v619 = vadd.f32 %v571, %v611
    %v620 = vadd.f32 %v572, %v612
    %v621 = vadd.f32 %v573, %v613
    %v622 = vadd.f32 %v574, %v614
    %v623 = vadd.f32 %v575, %v615
    %v624 = vadd.f32 %v576, %v616
    %v625 = vadd.f32 %v577, %v617
    %v626 = vadd.f32 %v578, %v618
    %627 = vrot.lane.b32.xlu0 %v436, 16
    %v628 = vpop.permute.xlu0 %627
    %629 = vrot.lane.b32.xlu0 %v439, 16
    %v630 = vpop.permute.xlu0 %629
    %631 = vrot.lane.b32.xlu0 %v442, 16
    %v632 = vpop.permute.xlu0 %631
    %633 = vrot.lane.b32.xlu0 %v445, 16
    %v634 = vpop.permute.xlu0 %633
    %635 = vrot.lane.b32.xlu0 %v465, 16
    %v636 = vpop.permute.xlu0 %635
    %637 = vrot.lane.b32.xlu0 %v468, 16
    %v638 = vpop.permute.xlu0 %637
    %639 = vrot.lane.b32.xlu0 %v471, 16
    %v640 = vpop.permute.xlu0 %639
    %641 = vrot.lane.b32.xlu0 %v474, 16
    %v642 = vpop.permute.xlu0 %641
    %v643 = vsel %vm525, %v628, %v636
    %v644 = vsel %vm525, %v630, %v638
    %v645 = vsel %vm525, %v632, %v640
    %v646 = vsel %vm525, %v634, %v642
    %v647 = vsel %vm525, %v636, %v628
    %v648 = vsel %vm525, %v638, %v630
    %v649 = vsel %vm525, %v640, %v632
    %v650 = vsel %vm525, %v642, %v634
    %s651 = scalar_lea.vmem [#allocation8], 3
    %v652 = vld [vmem:[%s651] ss:$8 sm:$0x3]
    %v654 = vperm.slane %v652, 0
    %v655 = vperm.slane %v652, 1
    %v658 = vmul.f32 %v647, %v654
    %v659 = vmul.f32 %v643, %v655
    %v660 = vmul.f32 %v648, %v654
    %v661 = vmul.f32 %v644, %v655
    %v662 = vmul.f32 %v649, %v654
    %v663 = vmul.f32 %v645, %v655
    %v664 = vmul.f32 %v650, %v654
    %v665 = vmul.f32 %v646, %v655
    %v666 = vadd.f32 %v619, %v658
    %v667 = vadd.f32 %v620, %v659
    %v668 = vadd.f32 %v621, %v660
    %v669 = vadd.f32 %v622, %v661
    %v670 = vadd.f32 %v623, %v662
    %v671 = vadd.f32 %v624, %v663
    %v672 = vadd.f32 %v625, %v664
    %v673 = vadd.f32 %v626, %v665
    %s674 = scalar_lea.vmem [#allocation8], 4
    %v675 = vld [vmem:[%s674] ss:$8 sm:$0x3]
    %v677 = vperm.slane %v675, 0
    %v678 = vperm.slane %v675, 1
    %v681 = vmul.f32 %v436, %v677
    %v682 = vmul.f32 %v465, %v678
    %v683 = vmul.f32 %v439, %v677
    %v684 = vmul.f32 %v468, %v678
    %v685 = vmul.f32 %v442, %v677
    %v686 = vmul.f32 %v471, %v678
    %v687 = vmul.f32 %v445, %v677
    %v688 = vmul.f32 %v474, %v678
    %v689 = vadd.f32 %v666, %v681
    %v690 = vadd.f32 %v667, %v682
    %v691 = vadd.f32 %v668, %v683
    %v692 = vadd.f32 %v669, %v684
    %v693 = vadd.f32 %v670, %v685
    %v694 = vadd.f32 %v671, %v686
    %v695 = vadd.f32 %v672, %v687
    %v696 = vadd.f32 %v673, %v688
    %697 = vrot.lane.b32.xlu0 %v436, 112
    %v698 = vpop.permute.xlu0 %697
    %699 = vrot.lane.b32.xlu0 %v439, 112
    %v700 = vpop.permute.xlu0 %699
    %701 = vrot.lane.b32.xlu0 %v442, 112
    %v702 = vpop.permute.xlu0 %701
    %703 = vrot.lane.b32.xlu0 %v445, 112
    %v704 = vpop.permute.xlu0 %703
    %705 = vrot.lane.b32.xlu0 %v465, 112
    %v706 = vpop.permute.xlu0 %705
    %707 = vrot.lane.b32.xlu0 %v468, 112
    %v708 = vpop.permute.xlu0 %707
    %709 = vrot.lane.b32.xlu0 %v471, 112
    %v710 = vpop.permute.xlu0 %709
    %711 = vrot.lane.b32.xlu0 %v474, 112
    %v712 = vpop.permute.xlu0 %711
    %v713 = vsel %vm595, %v698, %v706
    %v714 = vsel %vm595, %v700, %v708
    %v715 = vsel %vm595, %v702, %v710
    %v716 = vsel %vm595, %v704, %v712
    %v717 = vsel %vm595, %v706, %v698
    %v718 = vsel %vm595, %v708, %v700
    %v719 = vsel %vm595, %v710, %v702
    %v720 = vsel %vm595, %v712, %v704
    %s721 = scalar_lea.vmem [#allocation8], 5
    %v722 = vld [vmem:[%s721] ss:$8 sm:$0x3]
    %v724 = vperm.slane %v722, 0
    %v725 = vperm.slane %v722, 1
    %v728 = vmul.f32 %v713, %v724
    %v729 = vmul.f32 %v717, %v725
    %v730 = vmul.f32 %v714, %v724
    %v731 = vmul.f32 %v718, %v725
    %v732 = vmul.f32 %v715, %v724
    %v733 = vmul.f32 %v719, %v725
    %v734 = vmul.f32 %v716, %v724
    %v735 = vmul.f32 %v720, %v725
    %v736 = vadd.f32 %v689, %v728
    %v737 = vadd.f32 %v690, %v729
    %v738 = vadd.f32 %v691, %v730
    %v739 = vadd.f32 %v692, %v731
    %v740 = vadd.f32 %v693, %v732
    %v741 = vadd.f32 %v694, %v733
    %v742 = vadd.f32 %v695, %v734
    %v743 = vadd.f32 %v696, %v735
    %v744 = vrot.slane %v436, 1
    %v745 = vrot.slane %v465, 1
    %v746 = vrot.slane %v439, 1
    %v747 = vrot.slane %v468, 1
    %v748 = vrot.slane %v442, 1
    %v749 = vrot.slane %v471, 1
    %v750 = vrot.slane %v445, 1
    %v751 = vrot.slane %v474, 1
    %v752 = vsel %vm344, %v748, %v750
    %v753 = vsel %vm344, %v749, %v751
    %v754 = vsel %vm344, %v746, %v748
    %v755 = vsel %vm344, %v747, %v749
    %v756 = vsel %vm344, %v744, %v746
    %v757 = vsel %vm344, %v745, %v747
    %v758 = vsel %vm344, %v750, %v744
    %v759 = vsel %vm344, %v751, %v745
    %v760 = vsel %vm353, %v756, 0.0
    %v761 = vsel %vm353, %v757, 0.0
    %v762 = vsel %vm354, %v754, 0.0
    %v763 = vsel %vm354, %v755, 0.0
    %v764 = vsel %vm355, %v752, 0.0
    %v765 = vsel %vm355, %v753, 0.0
    %v766 = vsel %vm356, %v758, 0.0
    %v767 = vsel %vm356, %v759, 0.0
    %768 = vrot.lane.b32.xlu0 %v760, 16
    %v769 = vpop.permute.xlu0 %768
    %770 = vrot.lane.b32.xlu0 %v762, 16
    %v771 = vpop.permute.xlu0 %770
    %772 = vrot.lane.b32.xlu0 %v764, 16
    %v773 = vpop.permute.xlu0 %772
    %774 = vrot.lane.b32.xlu0 %v766, 16
    %v775 = vpop.permute.xlu0 %774
    %776 = vrot.lane.b32.xlu0 %v761, 16
    %v777 = vpop.permute.xlu0 %776
    %778 = vrot.lane.b32.xlu0 %v763, 16
    %v779 = vpop.permute.xlu0 %778
    %780 = vrot.lane.b32.xlu0 %v765, 16
    %v781 = vpop.permute.xlu0 %780
    %782 = vrot.lane.b32.xlu0 %v767, 16
    %v783 = vpop.permute.xlu0 %782
    %v784 = vsel %vm525, %v769, %v777
    %v785 = vsel %vm525, %v771, %v779
    %v786 = vsel %vm525, %v773, %v781
    %v787 = vsel %vm525, %v775, %v783
    %v788 = vsel %vm525, %v777, %v769
    %v789 = vsel %vm525, %v779, %v771
    %v790 = vsel %vm525, %v781, %v773
    %v791 = vsel %vm525, %v783, %v775
    %s792 = scalar_lea.vmem [#allocation8], 6
    %v793 = vld [vmem:[%s792] ss:$8 sm:$0x3]
    %v795 = vperm.slane %v793, 0
    %v796 = vperm.slane %v793, 1
    %v799 = vmul.f32 %v788, %v795
    %v800 = vmul.f32 %v784, %v796
    %v801 = vmul.f32 %v789, %v795
    %v802 = vmul.f32 %v785, %v796
    %v803 = vmul.f32 %v790, %v795
    %v804 = vmul.f32 %v786, %v796
    %v805 = vmul.f32 %v791, %v795
    %v806 = vmul.f32 %v787, %v796
    %v807 = vadd.f32 %v736, %v799
    %v808 = vadd.f32 %v737, %v800
    %v809 = vadd.f32 %v738, %v801
    %v810 = vadd.f32 %v739, %v802
    %v811 = vadd.f32 %v740, %v803
    %v812 = vadd.f32 %v741, %v804
    %v813 = vadd.f32 %v742, %v805
    %v814 = vadd.f32 %v743, %v806
    %s815 = scalar_lea.vmem [#allocation8], 7
    %v816 = vld [vmem:[%s815] ss:$8 sm:$0x3]
    %v818 = vperm.slane %v816, 0
    %v819 = vperm.slane %v816, 1
    %v822 = vmul.f32 %v760, %v818
    %v823 = vmul.f32 %v761, %v819
    %v824 = vmul.f32 %v762, %v818
    %v825 = vmul.f32 %v763, %v819
    %v826 = vmul.f32 %v764, %v818
    %v827 = vmul.f32 %v765, %v819
    %v828 = vmul.f32 %v766, %v818
    %v829 = vmul.f32 %v767, %v819
    %v830 = vadd.f32 %v807, %v822
    %v831 = vadd.f32 %v808, %v823
    %v832 = vadd.f32 %v809, %v824
    %v833 = vadd.f32 %v810, %v825
    %v834 = vadd.f32 %v811, %v826
    %v835 = vadd.f32 %v812, %v827
    %v836 = vadd.f32 %v813, %v828
    %v837 = vadd.f32 %v814, %v829
    %838 = vrot.lane.b32.xlu0 %v760, 112
    %v839 = vpop.permute.xlu0 %838
    %840 = vrot.lane.b32.xlu0 %v762, 112
    %v841 = vpop.permute.xlu0 %840
    %842 = vrot.lane.b32.xlu0 %v764, 112
    %v843 = vpop.permute.xlu0 %842
    %844 = vrot.lane.b32.xlu0 %v766, 112
    %v845 = vpop.permute.xlu0 %844
    %846 = vrot.lane.b32.xlu0 %v761, 112
    %v847 = vpop.permute.xlu0 %846
    %848 = vrot.lane.b32.xlu0 %v763, 112
    %v849 = vpop.permute.xlu0 %848
    %850 = vrot.lane.b32.xlu0 %v765, 112
    %v851 = vpop.permute.xlu0 %850
    %852 = vrot.lane.b32.xlu0 %v767, 112
    %v853 = vpop.permute.xlu0 %852
    %v854 = vsel %vm595, %v839, %v847
    %v855 = vsel %vm595, %v841, %v849
    %v856 = vsel %vm595, %v843, %v851
    %v857 = vsel %vm595, %v845, %v853
    %v858 = vsel %vm595, %v847, %v839
    %v859 = vsel %vm595, %v849, %v841
    %v860 = vsel %vm595, %v851, %v843
    %v861 = vsel %vm595, %v853, %v845
    %s862 = scalar_lea.vmem [#allocation8], 16
    %v863 = vld [vmem:[%s862] ss:$8 sm:$0x3]
    %v865 = vperm.slane %v863, 0
    %v866 = vperm.slane %v863, 1
    %v869 = vmul.f32 %v854, %v865
    %v870 = vmul.f32 %v858, %v866
    %v871 = vmul.f32 %v855, %v865
    %v872 = vmul.f32 %v859, %v866
    %v873 = vmul.f32 %v856, %v865
    %v874 = vmul.f32 %v860, %v866
    %v875 = vmul.f32 %v857, %v865
    %v876 = vmul.f32 %v861, %v866
    %v877 = vadd.f32 %v830, %v869
    %v878 = vadd.f32 %v831, %v870
    %v879 = vadd.f32 %v832, %v871
    %v880 = vadd.f32 %v833, %v872
    %v881 = vadd.f32 %v834, %v873
    %v882 = vadd.f32 %v835, %v874
    %v883 = vadd.f32 %v836, %v875
    %v884 = vadd.f32 %v837, %v876
    %v885 = vmax.f32 %v877, 0.0
    %v886 = vmax.f32 %v878, 0.0
    %v887 = vmax.f32 %v879, 0.0
    %v888 = vmax.f32 %v880, 0.0
    %v889 = vmax.f32 %v881, 0.0
    %v890 = vmax.f32 %v882, 0.0
    %v891 = vmax.f32 %v883, 0.0
    %v892 = vmax.f32 %v884, 0.0
    %893 = vst [vmem:[#allocation10] sm:$0xff] %v885
    %894 = vst [vmem:[#allocation10 + $0x8] sm:$0xff] %v886
    %895 = vst [vmem:[#allocation10 + $0x10] sm:$0xff] %v887
    %896 = vst [vmem:[#allocation10 + $0x18] sm:$0xff] %v888
    %897 = vst [vmem:[#allocation10 + $0x20] sm:$0xff] %v889
    %898 = vst [vmem:[#allocation10 + $0x28] sm:$0xff] %v890
    %899 = vst [vmem:[#allocation10 + $0x30] sm:$0xff] %v891
    %900 = vst [vmem:[#allocation10 + $0x38] sm:$0xff] %v892
    // Predicated region
    $region34: #{tpu_custom_call.1} parent=1 // pred_check
      _
    $region35: #{tpu_custom_call.1} parent=1 // pred_check_branch
      %902 = sbr.rel (0) target = $region37
    $region36: #{tpu_custom_call.1} parent=1 // pred_region
      %904 = vsyncadd [#allocation4], 0
      %s905 = sshll.u32 [#allocation10], 4
      %s906 = int_to_ptr.vmem [resolvable:$true] %s905
      %s907 = sshll.u32 %s4, 4
      %s908 = int_to_ptr.hbm [resolvable:$true] %s907
      %913 = dma.vmem_to_hbm [thread:$0]  %s906, 1024, %s908, [#allocation4], 256, 256, 16
    $region37: #{tpu_custom_call.1} parent=1 // pred_fallthru
      _
    // Predicated region
    $region38: #{tpu_custom_call.1} parent=1 // pred_check
      _
    $region39: #{tpu_custom_call.1} parent=1 // pred_check_branch
      %915 = sbr.rel (0) target = $region41
    $region40: #{tpu_custom_call.1} parent=1 // pred_region
      %917 = dma.done [#allocation4], 1024
    $region41: #{tpu_custom_call.1} parent=1 // pred_fallthru
      _
    %918 = vsyncpa [#allocation3], 1
    %919 = vsyncpa [#allocation6], 1
    %920 = vsyncpa [#allocation9], 1
    %921 = vsyncpa [#allocation4], 1

</llo_original>
